<compile_context>
chip_gen: v6e
topology: v6e:2x2x1
jax: 0.10.0
libtpu: 0.0.40
codegen_flags: <defaults>
</compile_context>

<pallas_src>
import numpy as np
import jax
import jax.numpy as jnp
from jax import lax
from jax.experimental import pallas as pl
from jax.experimental.pallas import tpu as pltpu


def get_padding(kernel_size, stride=1, dilation=1):
    return (stride - 1 + dilation * (kernel_size - 1)) // 2


def _binomial_coeffs(kernel_size):
    # identical to torch.tensor((np.poly1d((0.5, 0.5)) ** (kernel_size - 1)).coeffs)
    return np.asarray((np.poly1d((0.5, 0.5)) ** (kernel_size - 1)).coeffs,
                      dtype=np.float64)


def _reflect(t, size):
    # ReflectionPad2d index map (no edge repetition); valid while pad <= size-1.
    if t < 0:
        return -t
    if t >= size:
        return 2 * (size - 1) - t
    return t


def _blur_matrix(size_in, size_out, coeffs, stride, pad):
    """(size_out, size_in) operator folding reflection pad + 1-D binomial blur
    + stride:  (M @ v)[o] = sum_a coeffs[a] * v[reflect(o*stride + a - pad)]."""
    m = np.zeros((size_out, size_in), dtype=np.float64)
    for o in range(size_out):
        for a in range(len(coeffs)):
            m[o, _reflect(o * stride + a - pad, size_in)] += coeffs[a]
    return m


def _vmem_capacity_bytes():
    """Generation-aware VMEM capacity (128 MiB on v5e/v6e, 64 MiB per TC on v7x)."""
    try:
        cap = getattr(pltpu.get_tpu_info(), "vmem_capacity_bytes", None)
        if cap:
            return int(cap)
    except Exception:
        pass
    return 64 * 1024 * 1024  # conservative fallback (v7x per-TensorCore VMEM)


def _plane_step_bytes(p_blk, H, W, H_out, W_out, itemsize):
    """Per-grid-step VMEM footprint: double-buffered in/out blocks, the two
    constant blur matrices and the per-plane f32 temporaries."""
    in_b = p_blk * H * W * itemsize
    out_b = p_blk * H_out * W_out * itemsize
    mats = (H_out * H + W * W_out) * 4
    tmps = (H * W + H * W_out + H_out * W_out) * 4
    return 2 * (in_b + out_b) + 2 * mats + tmps


def _pick_plane_block(P, H, W, H_out, W_out, itemsize, budget_bytes):
    """Largest divisor of P = N*C such that a grid step (a) fits the VMEM
    budget with double buffering, (b) keeps the unrolled per-plane loop short,
    and (c) leaves >= 2 grid steps whenever P >= 2 (v7x megacore)."""
    plane_bytes = max(H * W * itemsize, 1)
    cap = max(16, min(64, -(-(2 << 20) // plane_bytes)))   # aim for ~2 MiB blocks
    best = 1
    for d in range(1, min(P, cap) + 1):
        if P % d:
            continue
        if _plane_step_bytes(d, H, W, H_out, W_out, itemsize) > budget_bytes:
            continue
        if P >= 2 and P // d < 2:
            continue
        best = d
    return best


def _blurpool_kernel(x_ref, a_ref, b_ref, o_ref):
    # x_ref: (P_blk, H, W)   a_ref: (H_out, H) f32   b_ref: (W, W_out) in x dtype
    # o_ref: (P_blk, H_out, W_out)
    a = a_ref[...]
    b = b_ref[...]
    for p in range(x_ref.shape[0]):               # short, statically unrolled
        xp = x_ref[p]                              # (H, W): H on sublanes, W on lanes
        # horizontal blur + stride + reflect: contract W (lanes) on the MXU
        y1 = jnp.dot(xp, b, preferred_element_type=jnp.float32)       # (H, W_out)
        # vertical blur + stride + reflect: contract H (sublanes), f32 accumulate
        y = jnp.dot(a, y1, preferred_element_type=jnp.float32)        # (H_out, W_out)
        o_ref[p] = y.astype(o_ref.dtype)


def blur_pool_2d(x, kernel_size=3, stride=2):
    """JAX/Pallas equivalent of holocron BlurPool2d.forward.  x: (N, C, H, W)."""
    if kernel_size <= 1:
        raise AssertionError
    N, C, H, W = x.shape
    pad = get_padding(kernel_size, stride, dilation=1)
    if not (pad < H and pad < W):
        raise ValueError("ReflectionPad2d requires pad < H and pad < W")

    coeffs = _binomial_coeffs(kernel_size)
    H_out = (H + 2 * pad - kernel_size) // stride + 1
    W_out = (W + 2 * pad - kernel_size) // stride + 1

    # Tiny constant operators folding reflection pad + binomial blur + stride.
    # B is kept in the input dtype so bf16 inputs use the bf16 MXU path; A stays
    # f32 because the second matmul consumes the f32 partial result.
    b_dtype = x.dtype if jnp.dtype(x.dtype) == jnp.dtype(jnp.bfloat16) else jnp.float32
    a_mat = jnp.asarray(_blur_matrix(H, H_out, coeffs, stride, pad), dtype=jnp.float32)
    b_mat = jnp.asarray(_blur_matrix(W, W_out, coeffs, stride, pad).T, dtype=b_dtype)

    # NCHW kept end to end: collapsing (N, C) -> planes is a free reshape.
    P = N * C
    x_planes = x.reshape(P, H, W)

    itemsize = jnp.dtype(x.dtype).itemsize
    cap = _vmem_capacity_bytes()
    budget = min(int(cap * 0.7), cap - (8 << 20))          # ~45 MiB v7x, ~90 MiB v5e/v6e
    p_blk = _pick_plane_block(P, H, W, H_out, W_out, itemsize, budget)
    # TODO(synk): if a *single* plane plus temporaries ever exceeds the budget
    # (H*W beyond roughly 4k x 4k in f32), add an H-tiled grid axis with a halo
    # of (kernel_size - 1) input rows; unnecessary for any realistic BlurPool use.
    vmem_limit = int(min(
        max(budget, _plane_step_bytes(p_blk, H, W, H_out, W_out, itemsize) + (4 << 20)),
        int(cap * 0.9)))

    out_planes = pl.pallas_call(
        _blurpool_kernel,
        out_shape=jax.ShapeDtypeStruct((P, H_out, W_out), x.dtype),
        grid=(P // p_blk,),
        in_specs=[
            pl.BlockSpec((p_blk, H, W), lambda g: (g, 0, 0)),
            pl.BlockSpec((H_out, H), lambda g: (0, 0)),   # constant operator, stays resident
            pl.BlockSpec((W, W_out), lambda g: (0, 0)),   # constant operator, stays resident
        ],
        out_specs=pl.BlockSpec((p_blk, H_out, W_out), lambda g: (g, 0, 0)),
        compiler_params=pltpu.CompilerParams(
            dimension_semantics=("parallel",),
            vmem_limit_bytes=vmem_limit,
        ),
    )(x_planes, a_mat, b_mat)

    return out_planes.reshape(N, C, H_out, W_out)


def _reference_blur_pool(x, kernel_size=3, stride=2):
    """Pure-JAX reference mirroring torch: reflection pad + depthwise conv."""
    N, C, H, W = x.shape
    pad = get_padding(kernel_size, stride, dilation=1)
    coeffs = _binomial_coeffs(kernel_size)
    filt = np.asarray(coeffs[:, None] * coeffs[None, :])
    xp = jnp.pad(x, ((0, 0), (0, 0), (pad, pad), (pad, pad)), mode="reflect")
    w = jnp.broadcast_to(jnp.asarray(filt, dtype=x.dtype)[None, None],
                         (C, 1, kernel_size, kernel_size))
    return lax.conv_general_dilated(
        xp, w, window_strides=(stride, stride), padding="VALID",
        dimension_numbers=("NCHW", "OIHW", "NCHW"), feature_group_count=C)


if __name__ == "__main__":
    key = jax.random.PRNGKey(0)
    N, C, H, W = 2, 4, 16, 16
    x = jax.random.normal(key, (N, C, H, W), dtype=jnp.float32)

    # Tolerances: the stencil runs on the MXU; depending on generation /
    # compiler the f32 matmul may use reduced-precision passes, so agreement is
    # checked at the ~1e-2 scale.  Structural errors (wrong reflection index,
    # stride or coefficient) would show up at O(0.1 - 1).
    TOL = dict(rtol=2e-2, atol=3e-2)

    # kernel_size=3, stride=2 (module defaults)
    f3 = jax.jit(lambda t: blur_pool_2d(t, kernel_size=3, stride=2))
    y = jax.block_until_ready(f3(x))
    y_ref = _reference_blur_pool(x, kernel_size=3, stride=2)
    assert y.shape == y_ref.shape, (y.shape, y_ref.shape)
    np.testing.assert_allclose(np.asarray(y), np.asarray(y_ref), **TOL)

    # kernel_size=5 (the other size the module supports)
    f5 = jax.jit(lambda t: blur_pool_2d(t, kernel_size=5, stride=2))
    y5 = jax.block_until_ready(f5(x))
    y5_ref = _reference_blur_pool(x, kernel_size=5, stride=2)
    assert y5.shape == y5_ref.shape, (y5.shape, y5_ref.shape)
    np.testing.assert_allclose(np.asarray(y5), np.asarray(y5_ref), **TOL)

    # stride=1 (blur without downsampling)
    fs1 = jax.jit(lambda t: blur_pool_2d(t, kernel_size=3, stride=1))
    ys1 = jax.block_until_ready(fs1(x))
    ys1_ref = _reference_blur_pool(x, kernel_size=3, stride=1)
    assert ys1.shape == ys1_ref.shape, (ys1.shape, ys1_ref.shape)
    np.testing.assert_allclose(np.asarray(ys1), np.asarray(ys1_ref), **TOL)

    # bf16 input: bf16 MXU path with f32 accumulation; compare against f32 ref
    # with a bf16-appropriate tolerance (addresses the review's bf16 concern).
    xb = x.astype(jnp.bfloat16)
    yb = jax.block_until_ready(f3(xb))
    np.testing.assert_allclose(np.asarray(yb.astype(jnp.float32)), np.asarray(y_ref),
                               rtol=5e-2, atol=5e-2)

    print("KERNEL_OK")
</pallas_src>

<mosaic_0001>
module attributes {stable_mosaic.version = 11 : i64} {
  func.func @_blurpool_kernel(%arg0: i32, %arg1: memref<4x16x16xf32, #tpu.memory_space<vmem>>, %arg2: memref<8x16xf32, #tpu.memory_space<vmem>>, %arg3: memref<16x8xf32, #tpu.memory_space<vmem>>, %arg4: memref<4x8x8xf32, #tpu.memory_space<vmem>>) attributes {dimension_semantics = [#tpu.dimension_semantics<parallel>], iteration_bounds = array<i64: 2>, scalar_prefetch = 0 : i64, scratch_operands = 0 : i64, tpu.core_type = #tpu.core_type<tc>, window_params = [{transform_indices = @transform_0, window_bounds = array<i64: 4, 16, 16>}, {pipeline_mode = #tpu.pipeline_mode<synchronous>, transform_indices = @transform_1, window_bounds = array<i64: 8, 16>}, {pipeline_mode = #tpu.pipeline_mode<synchronous>, transform_indices = @transform_2, window_bounds = array<i64: 16, 8>}, {transform_indices = @transform_3, window_bounds = array<i64: 4, 8, 8>}]} {
    %c0 = arith.constant 0 : index
    %c0_0 = arith.constant 0 : index
    %0 = vector.load %arg2[%c0, %c0_0] : memref<8x16xf32, #tpu.memory_space<vmem>>, vector<8x16xf32>
    %c0_1 = arith.constant 0 : index
    %c0_2 = arith.constant 0 : index
    %1 = vector.load %arg3[%c0_1, %c0_2] : memref<16x8xf32, #tpu.memory_space<vmem>>, vector<16x8xf32>
    %c0_3 = arith.constant 0 : index
    %c0_4 = arith.constant 0 : index
    %c0_5 = arith.constant 0 : index
    %2 = vector.load %arg1[%c0_3, %c0_4, %c0_5] : memref<4x16x16xf32, #tpu.memory_space<vmem>>, vector<1x16x16xf32>
    %3 = vector.shape_cast %2 : vector<1x16x16xf32> to vector<16x16xf32>
    %cst = arith.constant dense<0.000000e+00> : vector<16x8xf32>
    %4 = tpu.matmul %3, %1, %cst {dimension_numbers = #tpu.dot_dimension_numbers<[1], [0], [0], [1], [0, 0, 1, 1], [], []>} : vector<16x16xf32>, vector<16x8xf32>, vector<16x8xf32> -> vector<16x8xf32>
    %cst_6 = arith.constant dense<0.000000e+00> : vector<8x8xf32>
    %5 = tpu.matmul %0, %4, %cst_6 {dimension_numbers = #tpu.dot_dimension_numbers<[1], [0], [0], [1], [0, 0, 1, 1], [], []>} : vector<8x16xf32>, vector<16x8xf32>, vector<8x8xf32> -> vector<8x8xf32>
    %c0_7 = arith.constant 0 : index
    %c0_8 = arith.constant 0 : index
    %c0_9 = arith.constant 0 : index
    %6 = vector.load %arg4[%c0_7, %c0_8, %c0_9] : memref<4x8x8xf32, #tpu.memory_space<vmem>>, vector<1x8x8xf32>
    %7 = vector.shape_cast %6 : vector<1x8x8xf32> to vector<8x8xf32>
    %8 = vector.shape_cast %5 : vector<8x8xf32> to vector<1x8x8xf32>
    tpu.vector_store %arg4[%c0_7, %c0_8, %c0_9], %8 {strides = array<i32>} : memref<4x8x8xf32, #tpu.memory_space<vmem>>, vector<1x8x8xf32>,
    %c1 = arith.constant 1 : index
    %c0_10 = arith.constant 0 : index
    %c0_11 = arith.constant 0 : index
    %9 = vector.load %arg1[%c1, %c0_10, %c0_11] : memref<4x16x16xf32, #tpu.memory_space<vmem>>, vector<1x16x16xf32>
    %10 = vector.shape_cast %9 : vector<1x16x16xf32> to vector<16x16xf32>
    %cst_12 = arith.constant dense<0.000000e+00> : vector<16x8xf32>
    %11 = tpu.matmul %10, %1, %cst_12 {dimension_numbers = #tpu.dot_dimension_numbers<[1], [0], [0], [1], [0, 0, 1, 1], [], []>} : vector<16x16xf32>, vector<16x8xf32>, vector<16x8xf32> -> vector<16x8xf32>
    %cst_13 = arith.constant dense<0.000000e+00> : vector<8x8xf32>
    %12 = tpu.matmul %0, %11, %cst_13 {dimension_numbers = #tpu.dot_dimension_numbers<[1], [0], [0], [1], [0, 0, 1, 1], [], []>} : vector<8x16xf32>, vector<16x8xf32>, vector<8x8xf32> -> vector<8x8xf32>
    %c1_14 = arith.constant 1 : index
    %c0_15 = arith.constant 0 : index
    %c0_16 = arith.constant 0 : index
    %13 = vector.load %arg4[%c1_14, %c0_15, %c0_16] : memref<4x8x8xf32, #tpu.memory_space<vmem>>, vector<1x8x8xf32>
    %14 = vector.shape_cast %13 : vector<1x8x8xf32> to vector<8x8xf32>
    %15 = vector.shape_cast %12 : vector<8x8xf32> to vector<1x8x8xf32>
    tpu.vector_store %arg4[%c1_14, %c0_15, %c0_16], %15 {strides = array<i32>} : memref<4x8x8xf32, #tpu.memory_space<vmem>>, vector<1x8x8xf32>,
    %c2 = arith.constant 2 : index
    %c0_17 = arith.constant 0 : index
    %c0_18 = arith.constant 0 : index
    %16 = vector.load %arg1[%c2, %c0_17, %c0_18] : memref<4x16x16xf32, #tpu.memory_space<vmem>>, vector<1x16x16xf32>
    %17 = vector.shape_cast %16 : vector<1x16x16xf32> to vector<16x16xf32>
    %cst_19 = arith.constant dense<0.000000e+00> : vector<16x8xf32>
    %18 = tpu.matmul %17, %1, %cst_19 {dimension_numbers = #tpu.dot_dimension_numbers<[1], [0], [0], [1], [0, 0, 1, 1], [], []>} : vector<16x16xf32>, vector<16x8xf32>, vector<16x8xf32> -> vector<16x8xf32>
    %cst_20 = arith.constant dense<0.000000e+00> : vector<8x8xf32>
    %19 = tpu.matmul %0, %18, %cst_20 {dimension_numbers = #tpu.dot_dimension_numbers<[1], [0], [0], [1], [0, 0, 1, 1], [], []>} : vector<8x16xf32>, vector<16x8xf32>, vector<8x8xf32> -> vector<8x8xf32>
    %c2_21 = arith.constant 2 : index
    %c0_22 = arith.constant 0 : index
    %c0_23 = arith.constant 0 : index
    %20 = vector.load %arg4[%c2_21, %c0_22, %c0_23] : memref<4x8x8xf32, #tpu.memory_space<vmem>>, vector<1x8x8xf32>
    %21 = vector.shape_cast %20 : vector<1x8x8xf32> to vector<8x8xf32>
    %22 = vector.shape_cast %19 : vector<8x8xf32> to vector<1x8x8xf32>
    tpu.vector_store %arg4[%c2_21, %c0_22, %c0_23], %22 {strides = array<i32>} : memref<4x8x8xf32, #tpu.memory_space<vmem>>, vector<1x8x8xf32>,
    %c3 = arith.constant 3 : index
    %c0_24 = arith.constant 0 : index
    %c0_25 = arith.constant 0 : index
    %23 = vector.load %arg1[%c3, %c0_24, %c0_25] : memref<4x16x16xf32, #tpu.memory_space<vmem>>, vector<1x16x16xf32>
    %24 = vector.shape_cast %23 : vector<1x16x16xf32> to vector<16x16xf32>
    %cst_26 = arith.constant dense<0.000000e+00> : vector<16x8xf32>
    %25 = tpu.matmul %24, %1, %cst_26 {dimension_numbers = #tpu.dot_dimension_numbers<[1], [0], [0], [1], [0, 0, 1, 1], [], []>} : vector<16x16xf32>, vector<16x8xf32>, vector<16x8xf32> -> vector<16x8xf32>
    %cst_27 = arith.constant dense<0.000000e+00> : vector<8x8xf32>
    %26 = tpu.matmul %0, %25, %cst_27 {dimension_numbers = #tpu.dot_dimension_numbers<[1], [0], [0], [1], [0, 0, 1, 1], [], []>} : vector<8x16xf32>, vector<16x8xf32>, vector<8x8xf32> -> vector<8x8xf32>
    %c3_28 = arith.constant 3 : index
    %c0_29 = arith.constant 0 : index
    %c0_30 = arith.constant 0 : index
    %27 = vector.load %arg4[%c3_28, %c0_29, %c0_30] : memref<4x8x8xf32, #tpu.memory_space<vmem>>, vector<1x8x8xf32>
    %28 = vector.shape_cast %27 : vector<1x8x8xf32> to vector<8x8xf32>
    %29 = vector.shape_cast %26 : vector<8x8xf32> to vector<1x8x8xf32>
    tpu.vector_store %arg4[%c3_28, %c0_29, %c0_30], %29 {strides = array<i32>} : memref<4x8x8xf32, #tpu.memory_space<vmem>>, vector<1x8x8xf32>,
    return
  }
  func.func @transform_0(%arg0: i32) -> (i32, i32, i32) {
    %c0_i32 = arith.constant 0 : i32
    %c0_i32_0 = arith.constant 0 : i32
    %c0_i32_1 = arith.constant 0 : i32
    return %arg0, %c0_i32, %c0_i32_0 : i32, i32, i32
  }
  func.func @transform_1(%arg0: i32) -> (i32, i32) {
    %c0_i32 = arith.constant 0 : i32
    %c0_i32_0 = arith.constant 0 : i32
    %c0_i32_1 = arith.constant 0 : i32
    return %c0_i32, %c0_i32_0 : i32, i32
  }
  func.func @transform_2(%arg0: i32) -> (i32, i32) {
    %c0_i32 = arith.constant 0 : i32
    %c0_i32_0 = arith.constant 0 : i32
    %c0_i32_1 = arith.constant 0 : i32
    return %c0_i32, %c0_i32_0 : i32, i32
  }
  func.func @transform_3(%arg0: i32) -> (i32, i32, i32) {
    %c0_i32 = arith.constant 0 : i32
    %c0_i32_0 = arith.constant 0 : i32
    %c0_i32_1 = arith.constant 0 : i32
    return %arg0, %c0_i32, %c0_i32_0 : i32, i32, i32
  }
}

</mosaic_0001>

<llo_original>
// kernel: _lambda_.1
$region0: #{_lambda_.1}
  #allocation0 [shape = 'u32[]', space=smem, size = 0x4, offset = 0x4, fixed_abs, tag = 'smem constant byte address 0x4 - core index']
  #allocation1 [shape = 'u32[144,128]{1,0:T(1,128)}', space=vmem, size = 0x12000, scoped, tag = 'internal scratch']
  %s0 = inlined_call_operand.hbm [shape: f32[8,16,16], index: 0, kind: input, shape index: {}]
  %s1 = inlined_call_operand.hbm [shape: f32[8,16], index: 1, kind: input, shape index: {}]
  %s2 = inlined_call_operand.hbm [shape: f32[16,8], index: 2, kind: input, shape index: {}]
  %s3 = inlined_call_operand.hbm [shape: f32[8,8,8], index: 3, kind: output, shape index: {}]
  %s4 = sld [smem:[#allocation0]]
  $region57: #{_lambda_.1} parent=0
    _
  %s6 = ssub.s32 1, %s4
  %s7 = scalar_select 0, %s6, %s4
  $region1: #{_lambda_.1} parent=0
    #allocation2 [shape = 'u8[65536]{0}', space=vmem, size = 0x10000, scoped, tag = 'input window, operand 0']
    #allocation3 [shape = 's32[2]{0}', space=sflag, size = 0x8, scoped, tag = 'scoped memory for _lambda_.1']
    #allocation4 [shape = 's32[2]{0}', space=sflag, size = 0x8, scoped, tag = 'scoped memory for _lambda_.1']
    #allocation5 [shape = 'u8[4096]{0}', space=vmem, size = 0x1000, scoped, tag = 'input window, operand 1, single buffered']
    #allocation6 [shape = 's32[1]{0}', space=sflag, size = 0x4, scoped, tag = 'scoped memory for _lambda_.1']
    #allocation7 [shape = 'u8[8192]{0}', space=vmem, size = 0x2000, scoped, tag = 'input window, operand 2, single buffered']
    #allocation8 [shape = 'u8[32768]{0}', space=vmem, size = 0x8000, scoped, tag = 'output window, operand 0']
    %8 = vsyncpa [#allocation3], 0
    %s9 = scalar_lea.sflag [#allocation3], 1
    %10 = vsyncpa %s9, 0
    %11 = vsyncpa [#allocation6], 0
    %12 = vsyncpa [#allocation4], 0
    %s13 = scalar_lea.sflag [#allocation4], 1
    %14 = vsyncpa %s13, 0
    loop: start=0, step=1, limit=4
    $region2: #{_lambda_.1} parent=1 // loop_pre_header
      _
    $region3: #{_lambda_.1} parent=1 // loop_header
      %s16 = sphi 0, %s20
      %p17 = scmp.ge.s32.totalorder %s16, 4
      %s26 = sphi 0, %s28
      %s29 = sphi 0, %s26
      %s30 = sphi 0, %s29
      %s46 = sphi 0, %s30
      %s50 = sphi 0, %s50
      %s52 = sphi 0, %s50
      %s53 = sphi 0, %s52
      %s67 = sphi 0, %s53
      %s71 = sphi 0, %s71
      %s73 = sphi 0, %s71
      %s74 = sphi 0, %s73
      %s88 = sphi 0, %s74
      %s94 = sphi 0, %s96
      %s97 = sphi 0, %s94
      %s98 = sphi 0, %s97
      %s114 = sphi 0, %s98
    $region4: #{_lambda_.1} parent=1 // loop_header_branch
      %19 = sbr.rel (%p17) target = $region8
    $region5: #{_lambda_.1} parent=1 // loop_body
      %s21 = ssub.s32 %s16, 1
      %s22 = ssub.s32 %s16, 2
      %s23 = sadd.s32 %s16, 1
      %s24 = ssub.s32 %s16, %s23
      %p25 = scmp.eq.s32.totalorder %s24, 0
      %s27 = sadd.s32 %s26, 1
      %s28 = scalar_select %p25, %s26, %s27
      %p31 = pneg %p25
      %p32 = scmp.eq.s32.totalorder %s16, 1
      %p33 = por %p31, %p32
      %p34 = scmp.ne.s32.totalorder %s26, %s29
      %p35 = scmp.eq.s32.totalorder %s16, 0
      %p36 = por %p34, %p35
      %p37 = scmp.ne.s32.totalorder %s26, %s29
      %p38 = scmp.eq.s32.totalorder %s21, 1
      %p39 = por %p37, %p38
      %p40 = scmp.ne.s32.totalorder %s29, %s30
      %p41 = scmp.eq.s32.totalorder %s21, 0
      %p42 = por %p40, %p41
      %p43 = scmp.ne.s32.totalorder %s29, %s30
      %p44 = scmp.eq.s32.totalorder %s22, 1
      %p45 = por %p43, %p44
      %p47 = scmp.ne.s32.totalorder %s30, %s46
      %p48 = scmp.eq.s32.totalorder %s22, 0
      %p49 = por %p47, %p48
      %s51 = sadd.s32 %s50, 1
      %p54 = scmp.eq.s32.totalorder %s16, 1
      %p55 = scmp.ne.s32.totalorder %s50, %s52
      %p56 = scmp.eq.s32.totalorder %s16, 0
      %p57 = por %p55, %p56
      %p58 = scmp.ne.s32.totalorder %s50, %s52
      %p59 = scmp.eq.s32.totalorder %s21, 1
      %p60 = por %p58, %p59
      %p61 = scmp.ne.s32.totalorder %s52, %s53
      %p62 = scmp.eq.s32.totalorder %s21, 0
      %p63 = por %p61, %p62
      %p64 = scmp.ne.s32.totalorder %s52, %s53
      %p65 = scmp.eq.s32.totalorder %s22, 1
      %p66 = por %p64, %p65
      %p68 = scmp.ne.s32.totalorder %s53, %s67
      %p69 = scmp.eq.s32.totalorder %s22, 0
      %p70 = por %p68, %p69
      %s72 = sadd.s32 %s71, 1
      %p75 = scmp.eq.s32.totalorder %s16, 1
      %p76 = scmp.ne.s32.totalorder %s71, %s73
      %p77 = scmp.eq.s32.totalorder %s16, 0
      %p78 = por %p76, %p77
      %p79 = scmp.ne.s32.totalorder %s71, %s73
      %p80 = scmp.eq.s32.totalorder %s21, 1
      %p81 = por %p79, %p80
      %p82 = scmp.ne.s32.totalorder %s73, %s74
      %p83 = scmp.eq.s32.totalorder %s21, 0
      %p84 = por %p82, %p83
      %p85 = scmp.ne.s32.totalorder %s73, %s74
      %p86 = scmp.eq.s32.totalorder %s22, 1
      %p87 = por %p85, %p86
      %p89 = scmp.ne.s32.totalorder %s74, %s88
      %p90 = scmp.eq.s32.totalorder %s22, 0
      %p91 = por %p89, %p90
      %s92 = ssub.s32 %s16, %s23
      %p93 = scmp.eq.s32.totalorder %s92, 0
      %s95 = sadd.s32 %s94, 1
      %s96 = scalar_select %p93, %s94, %s95
      %p99 = pneg %p93
      %p100 = scmp.eq.s32.totalorder %s16, 1
      %p101 = por %p99, %p100
      %p102 = scmp.ne.s32.totalorder %s94, %s97
      %p103 = scmp.eq.s32.totalorder %s16, 0
      %p104 = por %p102, %p103
      %p105 = scmp.ne.s32.totalorder %s94, %s97
      %p106 = scmp.eq.s32.totalorder %s21, 1
      %p107 = por %p105, %p106
      %p108 = scmp.ne.s32.totalorder %s97, %s98
      %p109 = scmp.eq.s32.totalorder %s21, 0
      %p110 = por %p108, %p109
      %p111 = scmp.ne.s32.totalorder %s97, %s98
      %p112 = scmp.eq.s32.totalorder %s22, 1
      %p113 = por %p111, %p112
      %p115 = scmp.ne.s32.totalorder %s98, %s114
      %p116 = scmp.eq.s32.totalorder %s22, 0
      %p117 = por %p115, %p116
      %p118 = scmp.le.s32.totalorder 1, %s16
      %p119 = scmp.lt.s32.totalorder %s16, 3
      %p120 = pnand %p118, %p119
      %p121 = pneg %p120
      // Predicated region
      $region9: #{_lambda_.1} parent=5 // pred_check
        _
      $region10: #{_lambda_.1} parent=5 // pred_check_branch
        %123 = sbr.rel (%p120) target = $region12
      $region11: #{_lambda_.1} parent=5 // pred_region
        %s124 = ssub.s32 %s16, 1
        // Predicated region
        $region13: #{_lambda_.1} parent=11 // pred_check
          %p125 = pneg %p63
        $region14: #{_lambda_.1} parent=11 // pred_check_branch
          %127 = sbr.rel (%p125) target = $region16
        $region15: #{_lambda_.1} parent=11 // pred_region
          %s129 = ssub.s32 128, 128
          %130 = vsyncadd [#allocation6], %s129
          %s132 = sshll.u32 [#allocation5], 4
          %s133 = int_to_ptr.vmem [resolvable:$true] %s132
          %135 = dma.hbm_to_vmem [thread:$0]  %s1, 128, %s133, [#allocation6]
        $region16: #{_lambda_.1} parent=11 // pred_fallthru
          _
        // Predicated region
        $region17: #{_lambda_.1} parent=11 // pred_check
          %p136 = pneg %p84
        $region18: #{_lambda_.1} parent=11 // pred_check_branch
          %138 = sbr.rel (%p136) target = $region20
        $region19: #{_lambda_.1} parent=11 // pred_region
          %s140 = ssub.s32 256, 256
          %141 = vsyncadd [#allocation6], %s140
          %s142 = sshll.u32 [#allocation7], 4
          %s143 = int_to_ptr.vmem [resolvable:$true] %s142
          %148 = dma.hbm_to_vmem [thread:$0]  %s2, 256, %s143, [#allocation6], 128, 128, 8
        $region20: #{_lambda_.1} parent=11 // pred_fallthru
          _
      $region12: #{_lambda_.1} parent=5 // pred_fallthru
        _
      %p149 = scmp.lt.s32.totalorder %s16, 2
      // Predicated region
      $region21: #{_lambda_.1} parent=5 // pred_check
        %p150 = pneg %p149
      $region22: #{_lambda_.1} parent=5 // pred_check_branch
        %152 = sbr.rel (%p150) target = $region24
      $region23: #{_lambda_.1} parent=5 // pred_region
        // Predicated region
        $region25: #{_lambda_.1} parent=23 // pred_check
          %p153 = pneg %p36
        $region26: #{_lambda_.1} parent=23 // pred_check_branch
          %155 = sbr.rel (%p153) target = $region28
        $region27: #{_lambda_.1} parent=23 // pred_region
          %s156 = sand.u32 %s26, 1
          %s157 = scalar_lea.sflag [#allocation3], %s156
          %s158 = sand.u32 %s26, 1
          %s159 = smul.addr %s158, 64
          %s160 = scalar_lea.vmem [#allocation2], %s159
          %s161 = smul.u32 4, %s16
          %s163 = ssub.s32 1024, 1024
          %164 = vsyncadd %s157, %s163
          %s165 = smul.addr %s161, 2
          %s166 = smul.addr %s165, 128
          %s167 = scalar_lea.hbm %s0, %s166
          %s168 = sshll.u32 %s160, 4
          %s169 = int_to_ptr.vmem [resolvable:$true] %s168
          %174 = dma.hbm_to_vmem [thread:$0]  %s167, 1024, %s169, %s157, 128, 128, 8
        $region28: #{_lambda_.1} parent=23 // pred_fallthru
          _
      $region24: #{_lambda_.1} parent=5 // pred_fallthru
        _
      %p175 = scmp.le.s32.totalorder 1, %s16
      %p176 = scmp.lt.s32.totalorder %s16, 3
      %p177 = pnand %p175, %p176
      %p178 = pneg %p177
      // Predicated region
      $region29: #{_lambda_.1} parent=5 // pred_check
        _
      $region30: #{_lambda_.1} parent=5 // pred_check_branch
        %180 = sbr.rel (%p177) target = $region32
      $region31: #{_lambda_.1} parent=5 // pred_region
        %s181 = ssub.s32 %s16, 1
        %s182 = sand.u32 %s29, 1
        %s183 = scalar_lea.sflag [#allocation3], %s182
        %s184 = sand.u32 %s29, 1
        %s185 = smul.addr %s184, 64
        %s186 = scalar_lea.vmem [#allocation2], %s185
        // Predicated region
        $region33: #{_lambda_.1} parent=31 // pred_check
          %p187 = pneg %p42
        $region34: #{_lambda_.1} parent=31 // pred_check_branch
          %189 = sbr.rel (%p187) target = $region36
        $region35: #{_lambda_.1} parent=31 // pred_region
          %190 = dma.done %s183, 1024
        $region36: #{_lambda_.1} parent=31 // pred_fallthru
          _
        // Predicated region
        $region37: #{_lambda_.1} parent=31 // pred_check
          %p191 = pneg %p63
        $region38: #{_lambda_.1} parent=31 // pred_check_branch
          %193 = sbr.rel (%p191) target = $region40
        $region39: #{_lambda_.1} parent=31 // pred_region
          %194 = dma.done [#allocation6], 128
        $region40: #{_lambda_.1} parent=31 // pred_fallthru
          _
        // Predicated region
        $region41: #{_lambda_.1} parent=31 // pred_check
          %p195 = pneg %p84
        $region42: #{_lambda_.1} parent=31 // pred_check_branch
          %197 = sbr.rel (%p195) target = $region44
        $region43: #{_lambda_.1} parent=31 // pred_region
          %198 = dma.done [#allocation6], 256
        $region44: #{_lambda_.1} parent=31 // pred_fallthru
          _
        %s199 = sand.u32 %s29, 1
        %s200 = scalar_lea.sflag [#allocation3], %s199
        %s201 = sand.u32 %s29, 1
        %s202 = smul.addr %s201, 64
        %s203 = scalar_lea.vmem [#allocation2], %s202
        %p204 = pneg %p42
        %p205 = pneg %p39
        %p206 = pneg %p63
        %p207 = pneg %p60
        %p208 = pneg %p84
        %p209 = pneg %p81
        %p210 = pneg %p110
        %p211 = pneg %p107
        %s212 = sand.u32 %s97, 1
        %s213 = scalar_lea.sflag [#allocation4], %s212
        %s214 = sand.u32 %s97, 1
        %s215 = smul.addr %s214, 32
        %s216 = scalar_lea.vmem [#allocation8], %s215
        %s217 = smul.u32 4, %s21
        %s218 = smul.u32 4, %s21
        %v219 = vld [vmem:[#allocation5] sm:$0xff]
        %v220 = vld [vmem:[#allocation7] sm:$0xff]
        %v221 = vld [vmem:[#allocation7 + $0x8] sm:$0xff]
        %v222 = vld [vmem:[%s186] sm:$0xff]
        %v223 = vld [vmem:[%s186 + $0x8] sm:$0xff]
        %vm224 = vcmask 130048
        %v226 = vsel %vm224, %v222, 0
        %v229 = vsel %vm224, %v223, 0
        %231 = vmatprep.subr.mxu0 0.0
        %232 = vmatpush1.msra.mxu0 0.0
        %233 = vmatprep.subr.mxu0 0.0
        %234 = vmatpush1.msra.mxu0 0.0
        %235 = vmatprep.subr.mxu0 0.0
        %236 = vmatpush1.msra.mxu0 0.0
        %237 = vmatprep.subr.mxu0 0.0
        %238 = vmatpush1.msra.mxu0 0.0
        %239 = vmatprep.subr.mxu0 0.0
        %240 = vmatpush1.msra.mxu0 0.0
        %241 = vmatprep.subr.mxu0 0.0
        %242 = vmatpush1.msra.mxu0 0.0
        %243 = vmatprep.subr.mxu0 0.0
        %244 = vmatpush1.msra.mxu0 0.0
        %245 = vmatprep.subr.mxu0 0.0
        %246 = vmatpush1.msra.mxu0 0.0
        %247 = vmatprep.subr.mxu0 0.0
        %248 = vmatpush1.msra.mxu0 0.0
        %249 = vmatprep.subr.mxu0 0.0
        %250 = vmatpush1.msra.mxu0 0.0
        %251 = vmatprep.subr.mxu0 0.0
        %252 = vmatpush1.msra.mxu0 0.0
        %253 = vmatprep.subr.mxu0 0.0
        %254 = vmatpush1.msra.mxu0 0.0
        %255 = vmatprep.subr.mxu0 0.0
        %256 = vmatpush1.msra.mxu0 0.0
        %257 = vmatprep.subr.mxu0 0.0
        %258 = vmatpush1.msra.mxu0 0.0
        %259 = vmatprep.subr.mxu0 0.0
        %260 = vmatpush1.msra.mxu0 %v221
        %261 = vmatprep.subr.mxu0 0.0
        %262 = vmatpush1.msra.mxu0 %v220
        %263 = vmatprep.subr.mxu0 0.0
        %264 = vmatpush2.msra.mxu0 0.0
        %265 = vmatprep.subr.mxu0 0.0
        %266 = vmatpush2.msra.mxu0 0.0
        %267 = vmatprep.subr.mxu0 0.0
        %268 = vmatpush2.msra.mxu0 0.0
        %269 = vmatprep.subr.mxu0 0.0
        %270 = vmatpush2.msra.mxu0 0.0
        %271 = vmatprep.subr.mxu0 0.0
        %272 = vmatpush2.msra.mxu0 0.0
        %273 = vmatprep.subr.mxu0 0.0
        %274 = vmatpush2.msra.mxu0 0.0
        %275 = vmatprep.subr.mxu0 0.0
        %276 = vmatpush2.msra.mxu0 0.0
        %277 = vmatprep.subr.mxu0 0.0
        %278 = vmatpush2.msra.mxu0 0.0
        %279 = vmatprep.subr.mxu0 0.0
        %280 = vmatpush2.msra.mxu0 0.0
        %281 = vmatprep.subr.mxu0 0.0
        %282 = vmatpush2.msra.mxu0 0.0
        %283 = vmatprep.subr.mxu0 0.0
        %284 = vmatpush2.msra.mxu0 0.0
        %285 = vmatprep.subr.mxu0 0.0
        %286 = vmatpush2.msra.mxu0 0.0
        %287 = vmatprep.subr.mxu0 0.0
        %288 = vmatpush2.msra.mxu0 0.0
        %289 = vmatprep.subr.mxu0 0.0
        %290 = vmatpush2.msra.mxu0 0.0
        %291 = vmatprep.subr.mxu0 0.0
        %292 = vmatpush2.msra.mxu0 0.0
        %293 = vmatprep.subr.mxu0 0.0
        %294 = vmatpush2.msra.mxu0 0.0
        %295 = vmatprep.mubr.f32.mxu0 0.0
        %296 = vmatmul.mubr.f32.gmra.mxu0 %v226
        %v297 = vpop.f32.mrf.mxu0
        %v298 = vadd.f32 0.0, %v297
        %v299 = vpop.f32.mrf.mxu0
        %300 = vmatprep.mubr.f32.mxu0 0.0
        %301 = vmatmul.mubr.f32.gmra.mxu0 %v229
        %v302 = vpop.f32.mrf.mxu0
        %v303 = vadd.f32 0.0, %v302
        %v304 = vpop.f32.mrf.mxu0
        %305 = vdwg.mxu0
        %v307 = vsel %vm224, %v219, 0
        %309 = vmatprep.subr.mxu0 0.0
        %310 = vmatpush1.msra.mxu0 0.0
        %311 = vmatprep.subr.mxu0 0.0
        %312 = vmatpush1.msra.mxu0 0.0
        %313 = vmatprep.subr.mxu0 0.0
        %314 = vmatpush1.msra.mxu0 0.0
        %315 = vmatprep.subr.mxu0 0.0
        %316 = vmatpush1.msra.mxu0 0.0
        %317 = vmatprep.subr.mxu0 0.0
        %318 = vmatpush1.msra.mxu0 0.0
        %319 = vmatprep.subr.mxu0 0.0
        %320 = vmatpush1.msra.mxu0 0.0
        %321 = vmatprep.subr.mxu0 0.0
        %322 = vmatpush1.msra.mxu0 0.0
        %323 = vmatprep.subr.mxu0 0.0
        %324 = vmatpush1.msra.mxu0 0.0
        %325 = vmatprep.subr.mxu0 0.0
        %326 = vmatpush1.msra.mxu0 0.0
        %327 = vmatprep.subr.mxu0 0.0
        %328 = vmatpush1.msra.mxu0 0.0
        %329 = vmatprep.subr.mxu0 0.0
        %330 = vmatpush1.msra.mxu0 0.0
        %331 = vmatprep.subr.mxu0 0.0
        %332 = vmatpush1.msra.mxu0 0.0
        %333 = vmatprep.subr.mxu0 0.0
        %334 = vmatpush1.msra.mxu0 0.0
        %335 = vmatprep.subr.mxu0 0.0
        %336 = vmatpush1.msra.mxu0 0.0
        %337 = vmatprep.subr.mxu0 0.0
        %338 = vmatpush1.msra.mxu0 %v303
        %339 = vmatprep.subr.mxu0 0.0
        %340 = vmatpush1.msra.mxu0 %v298
        %341 = vmatprep.subr.mxu0 0.0
        %342 = vmatpush2.msra.mxu0 0.0
        %343 = vmatprep.subr.mxu0 0.0
        %344 = vmatpush2.msra.mxu0 0.0
        %345 = vmatprep.subr.mxu0 0.0
        %346 = vmatpush2.msra.mxu0 0.0
        %347 = vmatprep.subr.mxu0 0.0
        %348 = vmatpush2.msra.mxu0 0.0
        %349 = vmatprep.subr.mxu0 0.0
        %350 = vmatpush2.msra.mxu0 0.0
        %351 = vmatprep.subr.mxu0 0.0
        %352 = vmatpush2.msra.mxu0 0.0
        %353 = vmatprep.subr.mxu0 0.0
        %354 = vmatpush2.msra.mxu0 0.0
        %355 = vmatprep.subr.mxu0 0.0
        %356 = vmatpush2.msra.mxu0 0.0
        %357 = vmatprep.subr.mxu0 0.0
        %358 = vmatpush2.msra.mxu0 0.0
        %359 = vmatprep.subr.mxu0 0.0
        %360 = vmatpush2.msra.mxu0 0.0
        %361 = vmatprep.subr.mxu0 0.0
        %362 = vmatpush2.msra.mxu0 0.0
        %363 = vmatprep.subr.mxu0 0.0
        %364 = vmatpush2.msra.mxu0 0.0
        %365 = vmatprep.subr.mxu0 0.0
        %366 = vmatpush2.msra.mxu0 0.0
        %367 = vmatprep.subr.mxu0 0.0
        %368 = vmatpush2.msra.mxu0 0.0
        %369 = vmatprep.subr.mxu0 0.0
        %370 = vmatpush2.msra.mxu0 0.0
        %371 = vmatprep.subr.mxu0 0.0
        %372 = vmatpush2.msra.mxu0 0.0
        %373 = vmatprep.mubr.f32.mxu0 0.0
        %374 = vmatmul.mubr.f32.gmra.mxu0 %v307
        %v375 = vpop.f32.mrf.mxu0
        %v376 = vadd.f32 0.0, %v375
        %v377 = vpop.f32.mrf.mxu0
        %378 = vdwg.mxu0
        %vm379 = vcmask 64512
        %380 = vst.msk [vmem:[%s216] sm:$0xff] %vm379, %v376
        %s381 = scalar_lea.vmem %s186, 16 [#allocation2]
        %v382 = vld [vmem:[%s381] sm:$0xff]
        %v383 = vld [vmem:[%s381 + $0x8] sm:$0xff]
        %v385 = vsel %vm224, %v382, 0
        %v388 = vsel %vm224, %v383, 0
        %390 = vmatprep.subr.mxu0 0.0
        %391 = vmatpush1.msra.mxu0 0.0
        %392 = vmatprep.subr.mxu0 0.0
        %393 = vmatpush1.msra.mxu0 0.0
        %394 = vmatprep.subr.mxu0 0.0
        %395 = vmatpush1.msra.mxu0 0.0
        %396 = vmatprep.subr.mxu0 0.0
        %397 = vmatpush1.msra.mxu0 0.0
        %398 = vmatprep.subr.mxu0 0.0
        %399 = vmatpush1.msra.mxu0 0.0
        %400 = vmatprep.subr.mxu0 0.0
        %401 = vmatpush1.msra.mxu0 0.0
        %402 = vmatprep.subr.mxu0 0.0
        %403 = vmatpush1.msra.mxu0 0.0
        %404 = vmatprep.subr.mxu0 0.0
        %405 = vmatpush1.msra.mxu0 0.0
        %406 = vmatprep.subr.mxu0 0.0
        %407 = vmatpush1.msra.mxu0 0.0
        %408 = vmatprep.subr.mxu0 0.0
        %409 = vmatpush1.msra.mxu0 0.0
        %410 = vmatprep.subr.mxu0 0.0
        %411 = vmatpush1.msra.mxu0 0.0
        %412 = vmatprep.subr.mxu0 0.0
        %413 = vmatpush1.msra.mxu0 0.0
        %414 = vmatprep.subr.mxu0 0.0
        %415 = vmatpush1.msra.mxu0 0.0
        %416 = vmatprep.subr.mxu0 0.0
        %417 = vmatpush1.msra.mxu0 0.0
        %418 = vmatprep.subr.mxu0 0.0
        %419 = vmatpush1.msra.mxu0 %v221
        %420 = vmatprep.subr.mxu0 0.0
        %421 = vmatpush1.msra.mxu0 %v220
        %422 = vmatprep.subr.mxu0 0.0
        %423 = vmatpush2.msra.mxu0 0.0
        %424 = vmatprep.subr.mxu0 0.0
        %425 = vmatpush2.msra.mxu0 0.0
        %426 = vmatprep.subr.mxu0 0.0
        %427 = vmatpush2.msra.mxu0 0.0
        %428 = vmatprep.subr.mxu0 0.0
        %429 = vmatpush2.msra.mxu0 0.0
        %430 = vmatprep.subr.mxu0 0.0
        %431 = vmatpush2.msra.mxu0 0.0
        %432 = vmatprep.subr.mxu0 0.0
        %433 = vmatpush2.msra.mxu0 0.0
        %434 = vmatprep.subr.mxu0 0.0
        %435 = vmatpush2.msra.mxu0 0.0
        %436 = vmatprep.subr.mxu0 0.0
        %437 = vmatpush2.msra.mxu0 0.0
        %438 = vmatprep.subr.mxu0 0.0
        %439 = vmatpush2.msra.mxu0 0.0
        %440 = vmatprep.subr.mxu0 0.0
        %441 = vmatpush2.msra.mxu0 0.0
        %442 = vmatprep.subr.mxu0 0.0
        %443 = vmatpush2.msra.mxu0 0.0
        %444 = vmatprep.subr.mxu0 0.0
        %445 = vmatpush2.msra.mxu0 0.0
        %446 = vmatprep.subr.mxu0 0.0
        %447 = vmatpush2.msra.mxu0 0.0
        %448 = vmatprep.subr.mxu0 0.0
        %449 = vmatpush2.msra.mxu0 0.0
        %450 = vmatprep.subr.mxu0 0.0
        %451 = vmatpush2.msra.mxu0 0.0
        %452 = vmatprep.subr.mxu0 0.0
        %453 = vmatpush2.msra.mxu0 0.0
        %454 = vmatprep.mubr.f32.mxu0 0.0
        %455 = vmatmul.mubr.f32.gmra.mxu0 %v385
        %v456 = vpop.f32.mrf.mxu0
        %v457 = vadd.f32 0.0, %v456
        %v458 = vpop.f32.mrf.mxu0
        %459 = vmatprep.mubr.f32.mxu0 0.0
        %460 = vmatmul.mubr.f32.gmra.mxu0 %v388
        %v461 = vpop.f32.mrf.mxu0
        %v462 = vadd.f32 0.0, %v461
        %v463 = vpop.f32.mrf.mxu0
        %464 = vdwg.mxu0
        %465 = vmatprep.subr.mxu0 0.0
        %466 = vmatpush1.msra.mxu0 0.0
        %467 = vmatprep.subr.mxu0 0.0
        %468 = vmatpush1.msra.mxu0 0.0
        %469 = vmatprep.subr.mxu0 0.0
        %470 = vmatpush1.msra.mxu0 0.0
        %471 = vmatprep.subr.mxu0 0.0
        %472 = vmatpush1.msra.mxu0 0.0
        %473 = vmatprep.subr.mxu0 0.0
        %474 = vmatpush1.msra.mxu0 0.0
        %475 = vmatprep.subr.mxu0 0.0
        %476 = vmatpush1.msra.mxu0 0.0
        %477 = vmatprep.subr.mxu0 0.0
        %478 = vmatpush1.msra.mxu0 0.0
        %479 = vmatprep.subr.mxu0 0.0
        %480 = vmatpush1.msra.mxu0 0.0
        %481 = vmatprep.subr.mxu0 0.0
        %482 = vmatpush1.msra.mxu0 0.0
        %483 = vmatprep.subr.mxu0 0.0
        %484 = vmatpush1.msra.mxu0 0.0
        %485 = vmatprep.subr.mxu0 0.0
        %486 = vmatpush1.msra.mxu0 0.0
        %487 = vmatprep.subr.mxu0 0.0
        %488 = vmatpush1.msra.mxu0 0.0
        %489 = vmatprep.subr.mxu0 0.0
        %490 = vmatpush1.msra.mxu0 0.0
        %491 = vmatprep.subr.mxu0 0.0
        %492 = vmatpush1.msra.mxu0 0.0
        %493 = vmatprep.subr.mxu0 0.0
        %494 = vmatpush1.msra.mxu0 %v462
        %495 = vmatprep.subr.mxu0 0.0
        %496 = vmatpush1.msra.mxu0 %v457
        %497 = vmatprep.subr.mxu0 0.0
        %498 = vmatpush2.msra.mxu0 0.0
        %499 = vmatprep.subr.mxu0 0.0
        %500 = vmatpush2.msra.mxu0 0.0
        %501 = vmatprep.subr.mxu0 0.0
        %502 = vmatpush2.msra.mxu0 0.0
        %503 = vmatprep.subr.mxu0 0.0
        %504 = vmatpush2.msra.mxu0 0.0
        %505 = vmatprep.subr.mxu0 0.0
        %506 = vmatpush2.msra.mxu0 0.0
        %507 = vmatprep.subr.mxu0 0.0
        %508 = vmatpush2.msra.mxu0 0.0
        %509 = vmatprep.subr.mxu0 0.0
        %510 = vmatpush2.msra.mxu0 0.0
        %511 = vmatprep.subr.mxu0 0.0
        %512 = vmatpush2.msra.mxu0 0.0
        %513 = vmatprep.subr.mxu0 0.0
        %514 = vmatpush2.msra.mxu0 0.0
        %515 = vmatprep.subr.mxu0 0.0
        %516 = vmatpush2.msra.mxu0 0.0
        %517 = vmatprep.subr.mxu0 0.0
        %518 = vmatpush2.msra.mxu0 0.0
        %519 = vmatprep.subr.mxu0 0.0
        %520 = vmatpush2.msra.mxu0 0.0
        %521 = vmatprep.subr.mxu0 0.0
        %522 = vmatpush2.msra.mxu0 0.0
        %523 = vmatprep.subr.mxu0 0.0
        %524 = vmatpush2.msra.mxu0 0.0
        %525 = vmatprep.subr.mxu0 0.0
        %526 = vmatpush2.msra.mxu0 0.0
        %527 = vmatprep.subr.mxu0 0.0
        %528 = vmatpush2.msra.mxu0 0.0
        %529 = vmatprep.mubr.f32.mxu0 0.0
        %530 = vmatmul.mubr.f32.gmra.mxu0 %v307
        %v531 = vpop.f32.mrf.mxu0
        %v532 = vadd.f32 0.0, %v531
        %v533 = vpop.f32.mrf.mxu0
        %534 = vdwg.mxu0
        %s535 = scalar_lea.vmem %s216, 8 [#allocation8]
        %536 = vst.msk [vmem:[%s535] sm:$0xff] %vm379, %v532
        %s537 = scalar_lea.vmem %s186, 32 [#allocation2]
        %v538 = vld [vmem:[%s537] sm:$0xff]
        %v539 = vld [vmem:[%s537 + $0x8] sm:$0xff]
        %v541 = vsel %vm224, %v538, 0
        %v544 = vsel %vm224, %v539, 0
        %546 = vmatprep.subr.mxu0 0.0
        %547 = vmatpush1.msra.mxu0 0.0
        %548 = vmatprep.subr.mxu0 0.0
        %549 = vmatpush1.msra.mxu0 0.0
        %550 = vmatprep.subr.mxu0 0.0
        %551 = vmatpush1.msra.mxu0 0.0
        %552 = vmatprep.subr.mxu0 0.0
        %553 = vmatpush1.msra.mxu0 0.0
        %554 = vmatprep.subr.mxu0 0.0
        %555 = vmatpush1.msra.mxu0 0.0
        %556 = vmatprep.subr.mxu0 0.0
        %557 = vmatpush1.msra.mxu0 0.0
        %558 = vmatprep.subr.mxu0 0.0
        %559 = vmatpush1.msra.mxu0 0.0
        %560 = vmatprep.subr.mxu0 0.0
        %561 = vmatpush1.msra.mxu0 0.0
        %562 = vmatprep.subr.mxu0 0.0
        %563 = vmatpush1.msra.mxu0 0.0
        %564 = vmatprep.subr.mxu0 0.0
        %565 = vmatpush1.msra.mxu0 0.0
        %566 = vmatprep.subr.mxu0 0.0
        %567 = vmatpush1.msra.mxu0 0.0
        %568 = vmatprep.subr.mxu0 0.0
        %569 = vmatpush1.msra.mxu0 0.0
        %570 = vmatprep.subr.mxu0 0.0
        %571 = vmatpush1.msra.mxu0 0.0
        %572 = vmatprep.subr.mxu0 0.0
        %573 = vmatpush1.msra.mxu0 0.0
        %574 = vmatprep.subr.mxu0 0.0
        %575 = vmatpush1.msra.mxu0 %v221
        %576 = vmatprep.subr.mxu0 0.0
        %577 = vmatpush1.msra.mxu0 %v220
        %578 = vmatprep.subr.mxu0 0.0
        %579 = vmatpush2.msra.mxu0 0.0
        %580 = vmatprep.subr.mxu0 0.0
        %581 = vmatpush2.msra.mxu0 0.0
        %582 = vmatprep.subr.mxu0 0.0
        %583 = vmatpush2.msra.mxu0 0.0
        %584 = vmatprep.subr.mxu0 0.0
        %585 = vmatpush2.msra.mxu0 0.0
        %586 = vmatprep.subr.mxu0 0.0
        %587 = vmatpush2.msra.mxu0 0.0
        %588 = vmatprep.subr.mxu0 0.0
        %589 = vmatpush2.msra.mxu0 0.0
        %590 = vmatprep.subr.mxu0 0.0
        %591 = vmatpush2.msra.mxu0 0.0
        %592 = vmatprep.subr.mxu0 0.0
        %593 = vmatpush2.msra.mxu0 0.0
        %594 = vmatprep.subr.mxu0 0.0
        %595 = vmatpush2.msra.mxu0 0.0
        %596 = vmatprep.subr.mxu0 0.0
        %597 = vmatpush2.msra.mxu0 0.0
        %598 = vmatprep.subr.mxu0 0.0
        %599 = vmatpush2.msra.mxu0 0.0
        %600 = vmatprep.subr.mxu0 0.0
        %601 = vmatpush2.msra.mxu0 0.0
        %602 = vmatprep.subr.mxu0 0.0
        %603 = vmatpush2.msra.mxu0 0.0
        %604 = vmatprep.subr.mxu0 0.0
        %605 = vmatpush2.msra.mxu0 0.0
        %606 = vmatprep.subr.mxu0 0.0
        %607 = vmatpush2.msra.mxu0 0.0
        %608 = vmatprep.subr.mxu0 0.0
        %609 = vmatpush2.msra.mxu0 0.0
        %610 = vmatprep.mubr.f32.mxu0 0.0
        %611 = vmatmul.mubr.f32.gmra.mxu0 %v541
        %v612 = vpop.f32.mrf.mxu0
        %v613 = vadd.f32 0.0, %v612
        %v614 = vpop.f32.mrf.mxu0
        %615 = vmatprep.mubr.f32.mxu0 0.0
        %616 = vmatmul.mubr.f32.gmra.mxu0 %v544
        %v617 = vpop.f32.mrf.mxu0
        %v618 = vadd.f32 0.0, %v617
        %v619 = vpop.f32.mrf.mxu0
        %620 = vdwg.mxu0
        %621 = vmatprep.subr.mxu0 0.0
        %622 = vmatpush1.msra.mxu0 0.0
        %623 = vmatprep.subr.mxu0 0.0
        %624 = vmatpush1.msra.mxu0 0.0
        %625 = vmatprep.subr.mxu0 0.0
        %626 = vmatpush1.msra.mxu0 0.0
        %627 = vmatprep.subr.mxu0 0.0
        %628 = vmatpush1.msra.mxu0 0.0
        %629 = vmatprep.subr.mxu0 0.0
        %630 = vmatpush1.msra.mxu0 0.0
        %631 = vmatprep.subr.mxu0 0.0
        %632 = vmatpush1.msra.mxu0 0.0
        %633 = vmatprep.subr.mxu0 0.0
        %634 = vmatpush1.msra.mxu0 0.0
        %635 = vmatprep.subr.mxu0 0.0
        %636 = vmatpush1.msra.mxu0 0.0
        %637 = vmatprep.subr.mxu0 0.0
        %638 = vmatpush1.msra.mxu0 0.0
        %639 = vmatprep.subr.mxu0 0.0
        %640 = vmatpush1.msra.mxu0 0.0
        %641 = vmatprep.subr.mxu0 0.0
        %642 = vmatpush1.msra.mxu0 0.0
        %643 = vmatprep.subr.mxu0 0.0
        %644 = vmatpush1.msra.mxu0 0.0
        %645 = vmatprep.subr.mxu0 0.0
        %646 = vmatpush1.msra.mxu0 0.0
        %647 = vmatprep.subr.mxu0 0.0
        %648 = vmatpush1.msra.mxu0 0.0
        %649 = vmatprep.subr.mxu0 0.0
        %650 = vmatpush1.msra.mxu0 %v618
        %651 = vmatprep.subr.mxu0 0.0
        %652 = vmatpush1.msra.mxu0 %v613
        %653 = vmatprep.subr.mxu0 0.0
        %654 = vmatpush2.msra.mxu0 0.0
        %655 = vmatprep.subr.mxu0 0.0
        %656 = vmatpush2.msra.mxu0 0.0
        %657 = vmatprep.subr.mxu0 0.0
        %658 = vmatpush2.msra.mxu0 0.0
        %659 = vmatprep.subr.mxu0 0.0
        %660 = vmatpush2.msra.mxu0 0.0
        %661 = vmatprep.subr.mxu0 0.0
        %662 = vmatpush2.msra.mxu0 0.0
        %663 = vmatprep.subr.mxu0 0.0
        %664 = vmatpush2.msra.mxu0 0.0
        %665 = vmatprep.subr.mxu0 0.0
        %666 = vmatpush2.msra.mxu0 0.0
        %667 = vmatprep.subr.mxu0 0.0
        %668 = vmatpush2.msra.mxu0 0.0
        %669 = vmatprep.subr.mxu0 0.0
        %670 = vmatpush2.msra.mxu0 0.0
        %671 = vmatprep.subr.mxu0 0.0
        %672 = vmatpush2.msra.mxu0 0.0
        %673 = vmatprep.subr.mxu0 0.0
        %674 = vmatpush2.msra.mxu0 0.0
        %675 = vmatprep.subr.mxu0 0.0
        %676 = vmatpush2.msra.mxu0 0.0
        %677 = vmatprep.subr.mxu0 0.0
        %678 = vmatpush2.msra.mxu0 0.0
        %679 = vmatprep.subr.mxu0 0.0
        %680 = vmatpush2.msra.mxu0 0.0
        %681 = vmatprep.subr.mxu0 0.0
        %682 = vmatpush2.msra.mxu0 0.0
        %683 = vmatprep.subr.mxu0 0.0
        %684 = vmatpush2.msra.mxu0 0.0
        %685 = vmatprep.mubr.f32.mxu0 0.0
        %686 = vmatmul.mubr.f32.gmra.mxu0 %v307
        %v687 = vpop.f32.mrf.mxu0
        %v688 = vadd.f32 0.0, %v687
        %v689 = vpop.f32.mrf.mxu0
        %690 = vdwg.mxu0
        %s691 = scalar_lea.vmem %s216, 16 [#allocation8]
        %692 = vst.msk [vmem:[%s691] sm:$0xff] %vm379, %v688
        %s693 = scalar_lea.vmem %s186, 48 [#allocation2]
        %v694 = vld [vmem:[%s693] sm:$0xff]
        %v695 = vld [vmem:[%s693 + $0x8] sm:$0xff]
        %v697 = vsel %vm224, %v694, 0
        %v700 = vsel %vm224, %v695, 0
        %702 = vmatprep.subr.mxu0 0.0
        %703 = vmatpush1.msra.mxu0 0.0
        %704 = vmatprep.subr.mxu0 0.0
        %705 = vmatpush1.msra.mxu0 0.0
        %706 = vmatprep.subr.mxu0 0.0
        %707 = vmatpush1.msra.mxu0 0.0
        %708 = vmatprep.subr.mxu0 0.0
        %709 = vmatpush1.msra.mxu0 0.0
        %710 = vmatprep.subr.mxu0 0.0
        %711 = vmatpush1.msra.mxu0 0.0
        %712 = vmatprep.subr.mxu0 0.0
        %713 = vmatpush1.msra.mxu0 0.0
        %714 = vmatprep.subr.mxu0 0.0
        %715 = vmatpush1.msra.mxu0 0.0
        %716 = vmatprep.subr.mxu0 0.0
        %717 = vmatpush1.msra.mxu0 0.0
        %718 = vmatprep.subr.mxu0 0.0
        %719 = vmatpush1.msra.mxu0 0.0
        %720 = vmatprep.subr.mxu0 0.0
        %721 = vmatpush1.msra.mxu0 0.0
        %722 = vmatprep.subr.mxu0 0.0
        %723 = vmatpush1.msra.mxu0 0.0
        %724 = vmatprep.subr.mxu0 0.0
        %725 = vmatpush1.msra.mxu0 0.0
        %726 = vmatprep.subr.mxu0 0.0
        %727 = vmatpush1.msra.mxu0 0.0
        %728 = vmatprep.subr.mxu0 0.0
        %729 = vmatpush1.msra.mxu0 0.0
        %730 = vmatprep.subr.mxu0 0.0
        %731 = vmatpush1.msra.mxu0 %v221
        %732 = vmatprep.subr.mxu0 0.0
        %733 = vmatpush1.msra.mxu0 %v220
        %734 = vmatprep.subr.mxu0 0.0
        %735 = vmatpush2.msra.mxu0 0.0
        %736 = vmatprep.subr.mxu0 0.0
        %737 = vmatpush2.msra.mxu0 0.0
        %738 = vmatprep.subr.mxu0 0.0
        %739 = vmatpush2.msra.mxu0 0.0
        %740 = vmatprep.subr.mxu0 0.0
        %741 = vmatpush2.msra.mxu0 0.0
        %742 = vmatprep.subr.mxu0 0.0
        %743 = vmatpush2.msra.mxu0 0.0
        %744 = vmatprep.subr.mxu0 0.0
        %745 = vmatpush2.msra.mxu0 0.0
        %746 = vmatprep.subr.mxu0 0.0
        %747 = vmatpush2.msra.mxu0 0.0
        %748 = vmatprep.subr.mxu0 0.0
        %749 = vmatpush2.msra.mxu0 0.0
        %750 = vmatprep.subr.mxu0 0.0
        %751 = vmatpush2.msra.mxu0 0.0
        %752 = vmatprep.subr.mxu0 0.0
        %753 = vmatpush2.msra.mxu0 0.0
        %754 = vmatprep.subr.mxu0 0.0
        %755 = vmatpush2.msra.mxu0 0.0
        %756 = vmatprep.subr.mxu0 0.0
        %757 = vmatpush2.msra.mxu0 0.0
        %758 = vmatprep.subr.mxu0 0.0
        %759 = vmatpush2.msra.mxu0 0.0
        %760 = vmatprep.subr.mxu0 0.0
        %761 = vmatpush2.msra.mxu0 0.0
        %762 = vmatprep.subr.mxu0 0.0
        %763 = vmatpush2.msra.mxu0 0.0
        %764 = vmatprep.subr.mxu0 0.0
        %765 = vmatpush2.msra.mxu0 0.0
        %766 = vmatprep.mubr.f32.mxu0 0.0
        %767 = vmatmul.mubr.f32.gmra.mxu0 %v697
        %v768 = vpop.f32.mrf.mxu0
        %v769 = vadd.f32 0.0, %v768
        %v770 = vpop.f32.mrf.mxu0
        %771 = vmatprep.mubr.f32.mxu0 0.0
        %772 = vmatmul.mubr.f32.gmra.mxu0 %v700
        %v773 = vpop.f32.mrf.mxu0
        %v774 = vadd.f32 0.0, %v773
        %v775 = vpop.f32.mrf.mxu0
        %776 = vdwg.mxu0
        %777 = vmatprep.subr.mxu0 0.0
        %778 = vmatpush1.msra.mxu0 0.0
        %779 = vmatprep.subr.mxu0 0.0
        %780 = vmatpush1.msra.mxu0 0.0
        %781 = vmatprep.subr.mxu0 0.0
        %782 = vmatpush1.msra.mxu0 0.0
        %783 = vmatprep.subr.mxu0 0.0
        %784 = vmatpush1.msra.mxu0 0.0
        %785 = vmatprep.subr.mxu0 0.0
        %786 = vmatpush1.msra.mxu0 0.0
        %787 = vmatprep.subr.mxu0 0.0
        %788 = vmatpush1.msra.mxu0 0.0
        %789 = vmatprep.subr.mxu0 0.0
        %790 = vmatpush1.msra.mxu0 0.0
        %791 = vmatprep.subr.mxu0 0.0
        %792 = vmatpush1.msra.mxu0 0.0
        %793 = vmatprep.subr.mxu0 0.0
        %794 = vmatpush1.msra.mxu0 0.0
        %795 = vmatprep.subr.mxu0 0.0
        %796 = vmatpush1.msra.mxu0 0.0
        %797 = vmatprep.subr.mxu0 0.0
        %798 = vmatpush1.msra.mxu0 0.0
        %799 = vmatprep.subr.mxu0 0.0
        %800 = vmatpush1.msra.mxu0 0.0
        %801 = vmatprep.subr.mxu0 0.0
        %802 = vmatpush1.msra.mxu0 0.0
        %803 = vmatprep.subr.mxu0 0.0
        %804 = vmatpush1.msra.mxu0 0.0
        %805 = vmatprep.subr.mxu0 0.0
        %806 = vmatpush1.msra.mxu0 %v774
        %807 = vmatprep.subr.mxu0 0.0
        %808 = vmatpush1.msra.mxu0 %v769
        %809 = vmatprep.subr.mxu0 0.0
        %810 = vmatpush2.msra.mxu0 0.0
        %811 = vmatprep.subr.mxu0 0.0
        %812 = vmatpush2.msra.mxu0 0.0
        %813 = vmatprep.subr.mxu0 0.0
        %814 = vmatpush2.msra.mxu0 0.0
        %815 = vmatprep.subr.mxu0 0.0
        %816 = vmatpush2.msra.mxu0 0.0
        %817 = vmatprep.subr.mxu0 0.0
        %818 = vmatpush2.msra.mxu0 0.0
        %819 = vmatprep.subr.mxu0 0.0
        %820 = vmatpush2.msra.mxu0 0.0
        %821 = vmatprep.subr.mxu0 0.0
        %822 = vmatpush2.msra.mxu0 0.0
        %823 = vmatprep.subr.mxu0 0.0
        %824 = vmatpush2.msra.mxu0 0.0
        %825 = vmatprep.subr.mxu0 0.0
        %826 = vmatpush2.msra.mxu0 0.0
        %827 = vmatprep.subr.mxu0 0.0
        %828 = vmatpush2.msra.mxu0 0.0
        %829 = vmatprep.subr.mxu0 0.0
        %830 = vmatpush2.msra.mxu0 0.0
        %831 = vmatprep.subr.mxu0 0.0
        %832 = vmatpush2.msra.mxu0 0.0
        %833 = vmatprep.subr.mxu0 0.0
        %834 = vmatpush2.msra.mxu0 0.0
        %835 = vmatprep.subr.mxu0 0.0
        %836 = vmatpush2.msra.mxu0 0.0
        %837 = vmatprep.subr.mxu0 0.0
        %838 = vmatpush2.msra.mxu0 0.0
        %839 = vmatprep.subr.mxu0 0.0
        %840 = vmatpush2.msra.mxu0 0.0
        %841 = vmatprep.mubr.f32.mxu0 0.0
        %842 = vmatmul.mubr.f32.gmra.mxu0 %v307
        %v843 = vpop.f32.mrf.mxu0
        %v844 = vadd.f32 0.0, %v843
        %v845 = vpop.f32.mrf.mxu0
        %846 = vdwg.mxu0
        %s847 = scalar_lea.vmem %s216, 24 [#allocation8]
        %848 = vst.msk [vmem:[%s847] sm:$0xff] %vm379, %v844
        %s849 = sand.u32 %s97, 1
        %s850 = scalar_lea.sflag [#allocation4], %s849
        %s851 = sand.u32 %s97, 1
        %s852 = smul.addr %s851, 32
        %s853 = scalar_lea.vmem [#allocation8], %s852
        // Predicated region
        $region45: #{_lambda_.1} parent=31 // pred_check
          %p854 = pneg %p107
        $region46: #{_lambda_.1} parent=31 // pred_check_branch
          %856 = sbr.rel (%p854) target = $region48
        $region47: #{_lambda_.1} parent=31 // pred_region
          %s857 = smul.u32 4, %s21
          %s859 = ssub.s32 512, 512
          %860 = vsyncadd %s850, %s859
          %s861 = smul.addr %s857, 128
          %s862 = scalar_lea.hbm %s3, %s861
          %s863 = sshll.u32 %s853, 4
          %s864 = int_to_ptr.vmem [resolvable:$true] %s863
          %869 = dma.vmem_to_hbm [thread:$0]  %s864, 512, %s862, %s850, 128, 128, 8
        $region48: #{_lambda_.1} parent=31 // pred_fallthru
          _
      $region32: #{_lambda_.1} parent=5 // pred_fallthru
        _
      %p870 = scmp.le.s32.totalorder 2, %s16
      // Predicated region
      $region49: #{_lambda_.1} parent=5 // pred_check
        %p871 = pneg %p870
      $region50: #{_lambda_.1} parent=5 // pred_check_branch
        %873 = sbr.rel (%p871) target = $region52
      $region51: #{_lambda_.1} parent=5 // pred_region
        %s874 = ssub.s32 %s16, 2
        // Predicated region
        $region53: #{_lambda_.1} parent=51 // pred_check
          %p875 = pneg %p113
        $region54: #{_lambda_.1} parent=51 // pred_check_branch
          %877 = sbr.rel (%p875) target = $region56
        $region55: #{_lambda_.1} parent=51 // pred_region
          %s878 = sand.u32 %s98, 1
          %s879 = scalar_lea.sflag [#allocation4], %s878
          %s880 = sand.u32 %s98, 1
          %s881 = smul.addr %s880, 32
          %s882 = scalar_lea.vmem [#allocation8], %s881
          %883 = dma.done %s879, 512
        $region56: #{_lambda_.1} parent=51 // pred_fallthru
          _
      $region52: #{_lambda_.1} parent=5 // pred_fallthru
        _
    $region6: #{_lambda_.1} parent=1 // loop_footer
      %s20 = sadd.s32 1, %s16
    $region7: #{_lambda_.1} parent=1 // loop_footer_branch
      %15 = sbr.rel target = $region3
    $region8: #{_lambda_.1} parent=1 // loop_exit
      _
    %884 = vsyncpa [#allocation3], 1
    %s885 = scalar_lea.sflag [#allocation3], 1
    %886 = vsyncpa %s885, 1
    %887 = vsyncpa [#allocation6], 1
    %888 = vsyncpa [#allocation4], 1
    %s889 = scalar_lea.sflag [#allocation4], 1
    %890 = vsyncpa %s889, 1

</llo_original>
